<compile_context>
chip_gen: v5e
topology: v5e:2x2
jax: 0.10.0
libtpu: 0.0.40
codegen_flags: <defaults>
</compile_context>

<pallas_src>
import functools

import jax
import jax.numpy as jnp
from jax.experimental import pallas as pl
from jax.experimental.pallas import tpu as pltpu


def patch_embed_kernel(p_ref, w_ref, pos_ref, cls_ref, out_ref, acc_ref, *,
                       bt, n_patches, embed_dim):
    # p_ref:   (bt*nP, K)    bf16  -- bt images' patch vectors, row-flattened
    # w_ref:   (K, E)        bf16  -- flattened conv weight, transposed
    # pos_ref: (nP, E)       f32   -- pos_emb[1:] + conv_bias (bias pre-fused)
    # cls_ref: (1, E)        f32   -- cls_token + pos_emb[0]
    # out_ref: (bt, nP+1, E) bf16  -- final output block (cls row + patch rows)
    # acc_ref: (bt, nP+1, E) f32   -- VMEM assembly scratch (32-bit: offset
    #                                 stores are cheap / packing-safe)
    emb = jnp.dot(p_ref[...], w_ref[...],
                  preferred_element_type=jnp.float32)        # MXU, f32 accumulate
    emb = emb.reshape(bt, n_patches, embed_dim) + pos_ref[...][None, :, :]
    acc_ref[:, :1, :] = jnp.broadcast_to(cls_ref[...][None, :, :],
                                         (bt, 1, embed_dim))
    acc_ref[:, 1:, :] = emb
    # Single aligned, lane-dense bf16 store of the whole block to HBM.
    out_ref[...] = acc_ref[...].astype(out_ref.dtype)


def _vmem_capacity_bytes():
    try:
        return int(pltpu.get_tpu_info().vmem_capacity_bytes)
    except Exception:
        return 64 * 1024 * 1024  # conservative (v7x-sized) fallback


def _working_set_bytes(bt, n_patches, k, e, const_bufs):
    """Complete per-step VMEM footprint estimate (review: count everything)."""
    mt = bt * n_patches
    rows_out = n_patches + 1
    return (2 * mt * k * 2                     # patches block, double-buffered bf16
            + 2 * bt * rows_out * e * 2        # output block, double-buffered bf16
            + bt * rows_out * e * 4            # f32 assembly scratch
            + const_bufs * k * e * 2           # weight block bf16
            + const_bufs * n_patches * e * 4   # pos (+bias) block f32
            + const_bufs * e * 4)              # cls row f32


def _choose_bt(batch, n_patches, k, e, budget_bytes, const_bufs):
    """Images per grid step.

    Requirements: divides batch, fits the VMEM budget, bf16-native row
    alignment (mt % 16 == 0 unless full extent), and grid extent >= 2 when
    batch >= 2 (v7x megacore).  Prefers an even grid extent.
    """
    def legal(d, need_multi_step):
        if batch % d != 0:
            return False
        if _working_set_bytes(d, n_patches, k, e, const_bufs) > budget_bytes:
            return False
        if (d * n_patches) % 16 != 0 and d != batch:
            return False
        if need_multi_step and batch >= 2 and batch // d < 2:
            return False
        return True

    for need_multi_step in (True, False):
        cands = [d for d in range(1, batch + 1) if legal(d, need_multi_step)]
        if cands:
            for d in reversed(cands):
                if (batch // d) % 2 == 0:       # even grid extent if possible
                    return d
            return cands[-1]
    return batch  # full-extent row block is always layout-legal


@functools.partial(jax.jit,
                   static_argnames=("patch_size", "single_buffer_constants"))
def _forward_impl(x_nchw, conv_w, conv_b, cls_token, pos_emb, patch_size,
                  single_buffer_constants):
    B, C, H, W = x_nchw.shape
    ps = patch_size
    nH, nW = H // ps, W // ps
    n_patches = nH * nW
    E = conv_w.shape[0]
    K = C * ps * ps

    # im2col: NCHW -> (B*nP, K), patch vector ordered (c, kh, kw) to match
    # PyTorch Conv2d weight flattening.  Kept inside this jit so XLA fuses it.
    patches = x_nchw.reshape(B, C, nH, ps, nW, ps)
    patches = patches.transpose(0, 2, 4, 1, 3, 5)            # (B, nH, nW, C, ps, ps)
    patches = patches.reshape(B * n_patches, K).astype(jnp.bfloat16)

    w_flat = conv_w.reshape(E, K).T.astype(jnp.bfloat16)      # (K, E) bf16

    # Pre-fuse conv bias into the patch-row positional embedding (trace time).
    pos_patch = (pos_emb[0, 1:, :] + conv_b[None, :]).astype(jnp.float32)  # (nP, E)
    cls_row = (cls_token.reshape(1, E) + pos_emb[0, :1, :]).astype(jnp.float32)  # (1, E)

    const_bufs = 1 if single_buffer_constants else 2
    vmem_cap = _vmem_capacity_bytes()
    # Chip-aware tile budget: ~24 MiB on 64-MiB-VMEM parts (v7x), ~56 MiB on
    # 128-MiB parts (v5e/v6e), always backed by an explicit vmem_limit_bytes.
    budget = (24 << 20) if vmem_cap <= (64 << 20) else (56 << 20)
    bt = _choose_bt(B, n_patches, K, E, budget, const_bufs)
    mt = bt * n_patches

    ws = _working_set_bytes(bt, n_patches, K, E, const_bufs)
    vmem_limit = int(min(max(2 * ws + (4 << 20), 32 << 20), (vmem_cap * 3) // 4))

    maybe_buffered = ({"pipeline_mode": pl.Buffered(1)}
                      if single_buffer_constants else {})

    kernel = functools.partial(patch_embed_kernel, bt=bt,
                               n_patches=n_patches, embed_dim=E)

    cost = pl.CostEstimate(
        flops=2 * B * n_patches * K * E,
        transcendentals=0,
        bytes_accessed=(B * n_patches * K * 2        # patches (bf16)
                        + K * E * 2                  # weight (bf16)
                        + n_patches * E * 4          # pos (f32)
                        + E * 4                      # cls row (f32)
                        + B * (n_patches + 1) * E * 2))  # output (bf16)

    out = pl.pallas_call(
        kernel,
        out_shape=jax.ShapeDtypeStruct((B, n_patches + 1, E), jnp.bfloat16),
        grid_spec=pltpu.PrefetchScalarGridSpec(
            num_scalar_prefetch=0,
            grid=(B // bt,),
            in_specs=[
                pl.BlockSpec((mt, K), lambda i: (i, 0)),
                pl.BlockSpec((K, E), lambda i: (0, 0), **maybe_buffered),
                pl.BlockSpec((n_patches, E), lambda i: (0, 0), **maybe_buffered),
                pl.BlockSpec((1, E), lambda i: (0, 0), **maybe_buffered),
            ],
            out_specs=pl.BlockSpec((bt, n_patches + 1, E),
                                   lambda i: (i, 0, 0)),
            scratch_shapes=[pltpu.VMEM((bt, n_patches + 1, E), jnp.float32)],
        ),
        compiler_params=pltpu.CompilerParams(
            dimension_semantics=("parallel",),
            vmem_limit_bytes=vmem_limit),
        cost_estimate=cost,
    )(patches, w_flat, pos_patch, cls_row)

    # Dropout is identity in eval mode.
    return out


def patch_embedding_forward(x_nchw, conv_w, conv_b, cls_token, pos_emb,
                            patch_size):
    """x_nchw: (B, C, H, W) f32. Returns (B, num_patches+1, embed_dim) bf16."""
    try:
        return _forward_impl(x_nchw, conv_w, conv_b, cls_token, pos_emb,
                             patch_size=patch_size, single_buffer_constants=True)
    except Exception:
        # This jax build rejected pipeline_mode=pl.Buffered(1); rebuild with
        # default double-buffering (costs a little VMEM, same numerics).
        return _forward_impl(x_nchw, conv_w, conv_b, cls_token, pos_emb,
                             patch_size=patch_size, single_buffer_constants=False)


if __name__ == "__main__":
    # Small shapes consistent with the module (embed_dim kept lane-dense at 128).
    BATCH = 2
    IN_CHANNELS = 3
    IMAGE_SIZE = 16
    PATCH_SIZE = 4
    EMBED_DIM = 128
    NUM_PATCHES = (IMAGE_SIZE // PATCH_SIZE) ** 2  # 16

    key = jax.random.PRNGKey(0)
    k_x, k_w, k_b, k_cls, k_pos = jax.random.split(key, 5)

    x = jax.random.normal(k_x, (BATCH, IN_CHANNELS, IMAGE_SIZE, IMAGE_SIZE),
                          dtype=jnp.float32)
    # nn.Conv2d(in_channels, embed_dim, kernel_size=ps, stride=ps) parameters.
    conv_w = jax.random.normal(
        k_w, (EMBED_DIM, IN_CHANNELS, PATCH_SIZE, PATCH_SIZE),
        dtype=jnp.float32) * 0.02
    conv_b = jax.random.normal(k_b, (EMBED_DIM,), dtype=jnp.float32) * 0.02
    cls_token = jax.random.normal(k_cls, (1, 1, EMBED_DIM), dtype=jnp.float32)
    pos_emb = jax.random.normal(k_pos, (1, NUM_PATCHES + 1, EMBED_DIM),
                                dtype=jnp.float32)

    out = patch_embedding_forward(x, conv_w, conv_b, cls_token, pos_emb,
                                  PATCH_SIZE)
    out = jax.block_until_ready(out)

    # Reference check (pure JAX f32), same math as the PyTorch forward (eval).
    nH = IMAGE_SIZE // PATCH_SIZE
    patches_ref = x.reshape(BATCH, IN_CHANNELS, nH, PATCH_SIZE, nH, PATCH_SIZE)
    patches_ref = patches_ref.transpose(0, 2, 4, 1, 3, 5).reshape(
        BATCH, NUM_PATCHES, IN_CHANNELS * PATCH_SIZE * PATCH_SIZE)
    emb_ref = patches_ref @ conv_w.reshape(EMBED_DIM, -1).T + conv_b
    full_ref = jnp.concatenate(
        [jnp.broadcast_to(cls_token, (BATCH, 1, EMBED_DIM)), emb_ref], axis=1)
    full_ref = full_ref + pos_emb

    assert out.shape == (BATCH, NUM_PATCHES + 1, EMBED_DIM)
    assert out.dtype == jnp.bfloat16
    # bf16 MXU inputs + bf16 output (per perf review): small deviation from
    # the f32 reference is expected and acceptable for ViT.
    assert jnp.allclose(out.astype(jnp.float32), full_ref, atol=3e-2, rtol=3e-2)
    print("KERNEL_OK")
</pallas_src>

<mosaic_0001>
module attributes {stable_mosaic.version = 11 : i64} {
  func.func @patch_embed_kernel(%arg0: i32, %arg1: memref<16x48xbf16, #tpu.memory_space<vmem>>, %arg2: memref<48x128xbf16, #tpu.memory_space<vmem>>, %arg3: memref<16x128xf32, #tpu.memory_space<vmem>>, %arg4: memref<1x128xf32, #tpu.memory_space<vmem>>, %arg5: memref<1x17x128xbf16, #tpu.memory_space<vmem>>, %arg6: memref<1x17x128xf32, #tpu.memory_space<vmem>>) attributes {dimension_semantics = [#tpu.dimension_semantics<parallel>], iteration_bounds = array<i64: 2>, scalar_prefetch = 0 : i64, scratch_operands = 1 : i64, tpu.core_type = #tpu.core_type<tc>, window_params = [{transform_indices = @transform_0, window_bounds = array<i64: 16, 48>}, {pipeline_mode = #tpu.pipeline_mode<synchronous>, transform_indices = @transform_1, window_bounds = array<i64: 48, 128>}, {pipeline_mode = #tpu.pipeline_mode<synchronous>, transform_indices = @transform_2, window_bounds = array<i64: 16, 128>}, {pipeline_mode = #tpu.pipeline_mode<synchronous>, transform_indices = @transform_3, window_bounds = array<i64: 1, 128>}, {transform_indices = @transform_4, window_bounds = array<i64: 1, 17, 128>}]} {
    %c0 = arith.constant 0 : index
    %c0_0 = arith.constant 0 : index
    %0 = vector.load %arg1[%c0, %c0_0] : memref<16x48xbf16, #tpu.memory_space<vmem>>, vector<16x48xbf16>
    %c0_1 = arith.constant 0 : index
    %c0_2 = arith.constant 0 : index
    %1 = vector.load %arg2[%c0_1, %c0_2] : memref<48x128xbf16, #tpu.memory_space<vmem>>, vector<48x128xbf16>
    %cst = arith.constant dense<0.000000e+00> : vector<16x128xf32>
    %2 = tpu.matmul %0, %1, %cst {dimension_numbers = #tpu.dot_dimension_numbers<[1], [0], [0], [1], [0, 0, 1, 1], [], []>} : vector<16x48xbf16>, vector<48x128xbf16>, vector<16x128xf32> -> vector<16x128xf32>
    %3 = vector.shape_cast %2 : vector<16x128xf32> to vector<1x16x128xf32>
    %c0_3 = arith.constant 0 : index
    %c0_4 = arith.constant 0 : index
    %4 = vector.load %arg3[%c0_3, %c0_4] : memref<16x128xf32, #tpu.memory_space<vmem>>, vector<16x128xf32>
    %5 = vector.shape_cast %4 : vector<16x128xf32> to vector<1x16x128xf32>
    %6 = arith.addf %3, %5 : vector<1x16x128xf32>
    %c0_5 = arith.constant 0 : index
    %c0_6 = arith.constant 0 : index
    %7 = vector.load %arg4[%c0_5, %c0_6] : memref<1x128xf32, #tpu.memory_space<vmem>>, vector<1x128xf32>
    %8 = vector.shape_cast %7 : vector<1x128xf32> to vector<1x1x128xf32>
    %c0_7 = arith.constant 0 : index
    %c0_8 = arith.constant 0 : index
    %c0_9 = arith.constant 0 : index
    %9 = vector.load %arg6[%c0_7, %c0_8, %c0_9] : memref<1x17x128xf32, #tpu.memory_space<vmem>>, vector<1x1x128xf32>
    tpu.vector_store %arg6[%c0_7, %c0_8, %c0_9], %8 {strides = array<i32>} : memref<1x17x128xf32, #tpu.memory_space<vmem>>, vector<1x1x128xf32>,
    %c0_10 = arith.constant 0 : index
    %c1 = arith.constant 1 : index
    %c0_11 = arith.constant 0 : index
    %10 = vector.load %arg6[%c0_10, %c1, %c0_11] : memref<1x17x128xf32, #tpu.memory_space<vmem>>, vector<1x16x128xf32>
    tpu.vector_store %arg6[%c0_10, %c1, %c0_11], %6 {strides = array<i32>} : memref<1x17x128xf32, #tpu.memory_space<vmem>>, vector<1x16x128xf32>,
    %c0_12 = arith.constant 0 : index
    %c0_13 = arith.constant 0 : index
    %c0_14 = arith.constant 0 : index
    %11 = vector.load %arg6[%c0_12, %c0_13, %c0_14] : memref<1x17x128xf32, #tpu.memory_space<vmem>>, vector<1x17x128xf32>
    %12 = arith.truncf %11 : vector<1x17x128xf32> to vector<1x17x128xbf16>
    %c0_15 = arith.constant 0 : index
    %c0_16 = arith.constant 0 : index
    %c0_17 = arith.constant 0 : index
    %13 = vector.load %arg5[%c0_15, %c0_16, %c0_17] : memref<1x17x128xbf16, #tpu.memory_space<vmem>>, vector<1x17x128xbf16>
    tpu.vector_store %arg5[%c0_15, %c0_16, %c0_17], %12 {strides = array<i32>} : memref<1x17x128xbf16, #tpu.memory_space<vmem>>, vector<1x17x128xbf16>,
    return
  }
  func.func @transform_0(%arg0: i32) -> (i32, i32) {
    %c0_i32 = arith.constant 0 : i32
    %c0_i32_0 = arith.constant 0 : i32
    return %arg0, %c0_i32 : i32, i32
  }
  func.func @transform_1(%arg0: i32) -> (i32, i32) {
    %c0_i32 = arith.constant 0 : i32
    %c0_i32_0 = arith.constant 0 : i32
    %c0_i32_1 = arith.constant 0 : i32
    return %c0_i32, %c0_i32_0 : i32, i32
  }
  func.func @transform_2(%arg0: i32) -> (i32, i32) {
    %c0_i32 = arith.constant 0 : i32
    %c0_i32_0 = arith.constant 0 : i32
    %c0_i32_1 = arith.constant 0 : i32
    return %c0_i32, %c0_i32_0 : i32, i32
  }
  func.func @transform_3(%arg0: i32) -> (i32, i32) {
    %c0_i32 = arith.constant 0 : i32
    %c0_i32_0 = arith.constant 0 : i32
    %c0_i32_1 = arith.constant 0 : i32
    return %c0_i32, %c0_i32_0 : i32, i32
  }
  func.func @transform_4(%arg0: i32) -> (i32, i32, i32) {
    %c0_i32 = arith.constant 0 : i32
    %c0_i32_0 = arith.constant 0 : i32
    %c0_i32_1 = arith.constant 0 : i32
    return %arg0, %c0_i32, %c0_i32_0 : i32, i32, i32
  }
}

module attributes {stable_mosaic.version = 11 : i64} {
  func.func @patch_embed_kernel(%arg0: i32, %arg1: memref<16x48xbf16, #tpu.memory_space<vmem>>, %arg2: memref<48x128xbf16, #tpu.memory_space<vmem>>, %arg3: memref<16x128xf32, #tpu.memory_space<vmem>>, %arg4: memref<1x128xf32, #tpu.memory_space<vmem>>, %arg5: memref<1x17x128xbf16, #tpu.memory_space<vmem>>, %arg6: memref<1x17x128xf32, #tpu.memory_space<vmem>>) attributes {dimension_semantics = [#tpu.dimension_semantics<parallel>], iteration_bounds = array<i64: 2>, scalar_prefetch = 0 : i64, scratch_operands = 1 : i64, tpu.core_type = #tpu.core_type<tc>, window_params = [{transform_indices = @transform_0, window_bounds = array<i64: 16, 48>}, {pipeline_mode = #tpu.pipeline_mode<synchronous>, transform_indices = @transform_1, window_bounds = array<i64: 48, 128>}, {pipeline_mode = #tpu.pipeline_mode<synchronous>, transform_indices = @transform_2, window_bounds = array<i64: 16, 128>}, {pipeline_mode = #tpu.pipeline_mode<synchronous>, transform_indices = @transform_3, window_bounds = array<i64: 1, 128>}, {transform_indices = @transform_4, window_bounds = array<i64: 1, 17, 128>}]} {
    %c0 = arith.constant 0 : index
    %c0_0 = arith.constant 0 : index
    %0 = vector.load %arg1[%c0, %c0_0] : memref<16x48xbf16, #tpu.memory_space<vmem>>, vector<16x48xbf16>
    %c0_1 = arith.constant 0 : index
    %c0_2 = arith.constant 0 : index
    %1 = vector.load %arg2[%c0_1, %c0_2] : memref<48x128xbf16, #tpu.memory_space<vmem>>, vector<48x128xbf16>
    %cst = arith.constant dense<0.000000e+00> : vector<16x128xf32>
    %2 = tpu.matmul %0, %1, %cst {dimension_numbers = #tpu.dot_dimension_numbers<[1], [0], [0], [1], [0, 0, 1, 1], [], []>} : vector<16x48xbf16>, vector<48x128xbf16>, vector<16x128xf32> -> vector<16x128xf32>
    %3 = vector.shape_cast %2 : vector<16x128xf32> to vector<1x16x128xf32>
    %c0_3 = arith.constant 0 : index
    %c0_4 = arith.constant 0 : index
    %4 = vector.load %arg3[%c0_3, %c0_4] : memref<16x128xf32, #tpu.memory_space<vmem>>, vector<16x128xf32>
    %5 = vector.shape_cast %4 : vector<16x128xf32> to vector<1x16x128xf32>
    %6 = arith.addf %3, %5 : vector<1x16x128xf32>
    %c0_5 = arith.constant 0 : index
    %c0_6 = arith.constant 0 : index
    %7 = vector.load %arg4[%c0_5, %c0_6] : memref<1x128xf32, #tpu.memory_space<vmem>>, vector<1x128xf32>
    %8 = vector.shape_cast %7 : vector<1x128xf32> to vector<1x1x128xf32>
    %c0_7 = arith.constant 0 : index
    %c0_8 = arith.constant 0 : index
    %c0_9 = arith.constant 0 : index
    %9 = vector.load %arg6[%c0_7, %c0_8, %c0_9] : memref<1x17x128xf32, #tpu.memory_space<vmem>>, vector<1x1x128xf32>
    tpu.vector_store %arg6[%c0_7, %c0_8, %c0_9], %8 {strides = array<i32>} : memref<1x17x128xf32, #tpu.memory_space<vmem>>, vector<1x1x128xf32>,
    %c0_10 = arith.constant 0 : index
    %c1 = arith.constant 1 : index
    %c0_11 = arith.constant 0 : index
    %10 = vector.load %arg6[%c0_10, %c1, %c0_11] : memref<1x17x128xf32, #tpu.memory_space<vmem>>, vector<1x16x128xf32>
    tpu.vector_store %arg6[%c0_10, %c1, %c0_11], %6 {strides = array<i32>} : memref<1x17x128xf32, #tpu.memory_space<vmem>>, vector<1x16x128xf32>,
    %c0_12 = arith.constant 0 : index
    %c0_13 = arith.constant 0 : index
    %c0_14 = arith.constant 0 : index
    %11 = vector.load %arg6[%c0_12, %c0_13, %c0_14] : memref<1x17x128xf32, #tpu.memory_space<vmem>>, vector<1x17x128xf32>
    %12 = arith.truncf %11 : vector<1x17x128xf32> to vector<1x17x128xbf16>
    %c0_15 = arith.constant 0 : index
    %c0_16 = arith.constant 0 : index
    %c0_17 = arith.constant 0 : index
    %13 = vector.load %arg5[%c0_15, %c0_16, %c0_17] : memref<1x17x128xbf16, #tpu.memory_space<vmem>>, vector<1x17x128xbf16>
    tpu.vector_store %arg5[%c0_15, %c0_16, %c0_17], %12 {strides = array<i32>} : memref<1x17x128xbf16, #tpu.memory_space<vmem>>, vector<1x17x128xbf16>,
    return
  }
  func.func @transform_0(%arg0: i32) -> (i32, i32) {
    %c0_i32 = arith.constant 0 : i32
    %c0_i32_0 = arith.constant 0 : i32
    return %arg0, %c0_i32 : i32, i32
  }
  func.func @transform_1(%arg0: i32) -> (i32, i32) {
    %c0_i32 = arith.constant 0 : i32
    %c0_i32_0 = arith.constant 0 : i32
    %c0_i32_1 = arith.constant 0 : i32
    return %c0_i32, %c0_i32_0 : i32, i32
  }
  func.func @transform_2(%arg0: i32) -> (i32, i32) {
    %c0_i32 = arith.constant 0 : i32
    %c0_i32_0 = arith.constant 0 : i32
    %c0_i32_1 = arith.constant 0 : i32
    return %c0_i32, %c0_i32_0 : i32, i32
  }
  func.func @transform_3(%arg0: i32) -> (i32, i32) {
    %c0_i32 = arith.constant 0 : i32
    %c0_i32_0 = arith.constant 0 : i32
    %c0_i32_1 = arith.constant 0 : i32
    return %c0_i32, %c0_i32_0 : i32, i32
  }
  func.func @transform_4(%arg0: i32) -> (i32, i32, i32) {
    %c0_i32 = arith.constant 0 : i32
    %c0_i32_0 = arith.constant 0 : i32
    %c0_i32_1 = arith.constant 0 : i32
    return %arg0, %c0_i32, %c0_i32_0 : i32, i32, i32
  }
}

</mosaic_0001>

<llo_original>
// kernel: _forward_impl.1
$region0: #{_forward_impl.1}
  #allocation0 [shape = 'u32[]', space=smem, size = 0x4, offset = 0x4, fixed_abs, tag = 'smem constant byte address 0x4 - core index']
  #allocation1 [shape = 'u32[72,128]{1,0:T(1,128)}', space=vmem, size = 0x9000, scoped, tag = 'internal scratch']
  #allocation2 [shape = 'f32[1,17,128]{2,1,0:T(8,128)}', space=vmem, size = 0x3000, scoped, tag = 'scratch operand']
  %s0 = inlined_call_operand.vmem [shape: bf16[32,48], index: 0, kind: input, shape index: {}]
  %s1 = inlined_call_operand.vmem [shape: bf16[48,128], index: 1, kind: input, shape index: {}]
  %s2 = inlined_call_operand.vmem [shape: f32[16,128], index: 2, kind: input, shape index: {}]
  %s3 = inlined_call_operand.vmem [shape: f32[1,128], index: 3, kind: input, shape index: {}]
  %s4 = inlined_call_operand.vmem [shape: bf16[2,17,128], index: 4, kind: output, shape index: {}]
  %s5 = sld [smem:[#allocation0]]
  $region49: #{_forward_impl.1} parent=0
    _
  %s7 = ssub.s32 1, %s5
  %s8 = scalar_select 0, %s7, %s5
  loop: start=0, step=1, limit=4
  $region2: #{_forward_impl.1} parent=0 // loop_pre_header
    _
  $region3: #{_forward_impl.1} parent=0 // loop_header
    %s10 = sphi 0, %s14
    %p11 = scmp.ge.s32.totalorder %s10, 4
    %s20 = sphi 0, %s22
    %s23 = sphi 0, %s20
    %s24 = sphi 0, %s23
    %s40 = sphi 0, %s24
    %s44 = sphi 0, %s44
    %s46 = sphi 0, %s44
    %s47 = sphi 0, %s46
    %s61 = sphi 0, %s47
    %s65 = sphi 0, %s65
    %s67 = sphi 0, %s65
    %s68 = sphi 0, %s67
    %s82 = sphi 0, %s68
    %s86 = sphi 0, %s86
    %s88 = sphi 0, %s86
    %s89 = sphi 0, %s88
    %s103 = sphi 0, %s89
    %s109 = sphi 0, %s111
    %s112 = sphi 0, %s109
    %s113 = sphi 0, %s112
    %s129 = sphi 0, %s113
  $region4: #{_forward_impl.1} parent=0 // loop_header_branch
    %13 = sbr.rel (%p11) target = $region8
  $region5: #{_forward_impl.1} parent=0 // loop_body
    %s15 = ssub.s32 %s10, 1
    %s16 = ssub.s32 %s10, 2
    %s17 = sadd.s32 %s10, 1
    %s18 = ssub.s32 %s10, %s17
    %p19 = scmp.eq.s32.totalorder %s18, 0
    %s21 = sadd.s32 %s20, 1
    %s22 = scalar_select %p19, %s20, %s21
    %p25 = pneg %p19
    %p26 = scmp.eq.s32.totalorder %s10, 1
    %p27 = por %p25, %p26
    %p28 = scmp.ne.s32.totalorder %s20, %s23
    %p29 = scmp.eq.s32.totalorder %s10, 0
    %p30 = por %p28, %p29
    %p31 = scmp.ne.s32.totalorder %s20, %s23
    %p32 = scmp.eq.s32.totalorder %s15, 1
    %p33 = por %p31, %p32
    %p34 = scmp.ne.s32.totalorder %s23, %s24
    %p35 = scmp.eq.s32.totalorder %s15, 0
    %p36 = por %p34, %p35
    %p37 = scmp.ne.s32.totalorder %s23, %s24
    %p38 = scmp.eq.s32.totalorder %s16, 1
    %p39 = por %p37, %p38
    %p41 = scmp.ne.s32.totalorder %s24, %s40
    %p42 = scmp.eq.s32.totalorder %s16, 0
    %p43 = por %p41, %p42
    %s45 = sadd.s32 %s44, 1
    %p48 = scmp.eq.s32.totalorder %s10, 1
    %p49 = scmp.ne.s32.totalorder %s44, %s46
    %p50 = scmp.eq.s32.totalorder %s10, 0
    %p51 = por %p49, %p50
    %p52 = scmp.ne.s32.totalorder %s44, %s46
    %p53 = scmp.eq.s32.totalorder %s15, 1
    %p54 = por %p52, %p53
    %p55 = scmp.ne.s32.totalorder %s46, %s47
    %p56 = scmp.eq.s32.totalorder %s15, 0
    %p57 = por %p55, %p56
    %p58 = scmp.ne.s32.totalorder %s46, %s47
    %p59 = scmp.eq.s32.totalorder %s16, 1
    %p60 = por %p58, %p59
    %p62 = scmp.ne.s32.totalorder %s47, %s61
    %p63 = scmp.eq.s32.totalorder %s16, 0
    %p64 = por %p62, %p63
    %s66 = sadd.s32 %s65, 1
    %p69 = scmp.eq.s32.totalorder %s10, 1
    %p70 = scmp.ne.s32.totalorder %s65, %s67
    %p71 = scmp.eq.s32.totalorder %s10, 0
    %p72 = por %p70, %p71
    %p73 = scmp.ne.s32.totalorder %s65, %s67
    %p74 = scmp.eq.s32.totalorder %s15, 1
    %p75 = por %p73, %p74
    %p76 = scmp.ne.s32.totalorder %s67, %s68
    %p77 = scmp.eq.s32.totalorder %s15, 0
    %p78 = por %p76, %p77
    %p79 = scmp.ne.s32.totalorder %s67, %s68
    %p80 = scmp.eq.s32.totalorder %s16, 1
    %p81 = por %p79, %p80
    %p83 = scmp.ne.s32.totalorder %s68, %s82
    %p84 = scmp.eq.s32.totalorder %s16, 0
    %p85 = por %p83, %p84
    %s87 = sadd.s32 %s86, 1
    %p90 = scmp.eq.s32.totalorder %s10, 1
    %p91 = scmp.ne.s32.totalorder %s86, %s88
    %p92 = scmp.eq.s32.totalorder %s10, 0
    %p93 = por %p91, %p92
    %p94 = scmp.ne.s32.totalorder %s86, %s88
    %p95 = scmp.eq.s32.totalorder %s15, 1
    %p96 = por %p94, %p95
    %p97 = scmp.ne.s32.totalorder %s88, %s89
    %p98 = scmp.eq.s32.totalorder %s15, 0
    %p99 = por %p97, %p98
    %p100 = scmp.ne.s32.totalorder %s88, %s89
    %p101 = scmp.eq.s32.totalorder %s16, 1
    %p102 = por %p100, %p101
    %p104 = scmp.ne.s32.totalorder %s89, %s103
    %p105 = scmp.eq.s32.totalorder %s16, 0
    %p106 = por %p104, %p105
    %s107 = ssub.s32 %s10, %s17
    %p108 = scmp.eq.s32.totalorder %s107, 0
    %s110 = sadd.s32 %s109, 1
    %s111 = scalar_select %p108, %s109, %s110
    %p114 = pneg %p108
    %p115 = scmp.eq.s32.totalorder %s10, 1
    %p116 = por %p114, %p115
    %p117 = scmp.ne.s32.totalorder %s109, %s112
    %p118 = scmp.eq.s32.totalorder %s10, 0
    %p119 = por %p117, %p118
    %p120 = scmp.ne.s32.totalorder %s109, %s112
    %p121 = scmp.eq.s32.totalorder %s15, 1
    %p122 = por %p120, %p121
    %p123 = scmp.ne.s32.totalorder %s112, %s113
    %p124 = scmp.eq.s32.totalorder %s15, 0
    %p125 = por %p123, %p124
    %p126 = scmp.ne.s32.totalorder %s112, %s113
    %p127 = scmp.eq.s32.totalorder %s16, 1
    %p128 = por %p126, %p127
    %p130 = scmp.ne.s32.totalorder %s113, %s129
    %p131 = scmp.eq.s32.totalorder %s16, 0
    %p132 = por %p130, %p131
    %p133 = scmp.le.s32.totalorder 1, %s10
    %p134 = scmp.lt.s32.totalorder %s10, 3
    %p135 = pnand %p133, %p134
    %p136 = pneg %p135
    // Predicated region
    $region9: #{_forward_impl.1} parent=5 // pred_check
      _
    $region10: #{_forward_impl.1} parent=5 // pred_check_branch
      %138 = sbr.rel (%p135) target = $region12
    $region11: #{_forward_impl.1} parent=5 // pred_region
      %s139 = ssub.s32 %s10, 1
      // Predicated region
      $region13: #{_forward_impl.1} parent=11 // pred_check
        %p140 = pneg %p57
      $region14: #{_forward_impl.1} parent=11 // pred_check_branch
        %142 = sbr.rel (%p140) target = $region16
      $region15: #{_forward_impl.1} parent=11 // pred_region
        _
      $region16: #{_forward_impl.1} parent=11 // pred_fallthru
        _
      // Predicated region
      $region17: #{_forward_impl.1} parent=11 // pred_check
        %p143 = pneg %p78
      $region18: #{_forward_impl.1} parent=11 // pred_check_branch
        %145 = sbr.rel (%p143) target = $region20
      $region19: #{_forward_impl.1} parent=11 // pred_region
        _
      $region20: #{_forward_impl.1} parent=11 // pred_fallthru
        _
      // Predicated region
      $region21: #{_forward_impl.1} parent=11 // pred_check
        %p146 = pneg %p99
      $region22: #{_forward_impl.1} parent=11 // pred_check_branch
        %148 = sbr.rel (%p146) target = $region24
      $region23: #{_forward_impl.1} parent=11 // pred_region
        _
      $region24: #{_forward_impl.1} parent=11 // pred_fallthru
        _
    $region12: #{_forward_impl.1} parent=5 // pred_fallthru
      _
    %p149 = scmp.lt.s32.totalorder %s10, 2
    // Predicated region
    $region25: #{_forward_impl.1} parent=5 // pred_check
      %p150 = pneg %p149
    $region26: #{_forward_impl.1} parent=5 // pred_check_branch
      %152 = sbr.rel (%p150) target = $region28
    $region27: #{_forward_impl.1} parent=5 // pred_region
      // Predicated region
      $region29: #{_forward_impl.1} parent=27 // pred_check
        %p153 = pneg %p30
      $region30: #{_forward_impl.1} parent=27 // pred_check_branch
        %155 = sbr.rel (%p153) target = $region32
      $region31: #{_forward_impl.1} parent=27 // pred_region
        %s156 = smul.u32 2, %s10
        %p157 = scmp.lt.s32.totalorder %s156, 3
        %s158 = scalar_select %p157, %s156, 3
        %s159 = smul.addr %s158, 4
        %s160 = scalar_lea.vmem %s0, %s159
        %s161 = smul.u32 2, %s10
      $region32: #{_forward_impl.1} parent=27 // pred_fallthru
        _
    $region28: #{_forward_impl.1} parent=5 // pred_fallthru
      _
    %p162 = scmp.le.s32.totalorder 1, %s10
    %p163 = scmp.lt.s32.totalorder %s10, 3
    %p164 = pnand %p162, %p163
    %p165 = pneg %p164
    // Predicated region
    $region33: #{_forward_impl.1} parent=5 // pred_check
      _
    $region34: #{_forward_impl.1} parent=5 // pred_check_branch
      %167 = sbr.rel (%p164) target = $region36
    $region35: #{_forward_impl.1} parent=5 // pred_region
      %s168 = ssub.s32 %s10, 1
      %s169 = smul.u32 2, %s15
      %p170 = scmp.lt.s32.totalorder %s169, 3
      %s171 = scalar_select %p170, %s169, 3
      %s172 = smul.addr %s171, 4
      %s173 = scalar_lea.vmem %s0, %s172
      %p174 = pneg %p36
      %p175 = pneg %p33
      %p176 = pneg %p57
      %p177 = pneg %p54
      %p178 = pneg %p78
      %p179 = pneg %p75
      %p180 = pneg %p99
      %p181 = pneg %p96
      %p182 = pneg %p125
      %p183 = pneg %p122
      %p184 = scmp.lt.s32.totalorder %s15, 1
      %s185 = scalar_select %p184, %s15, 1
      %s186 = smul.addr %s185, 3
      %s187 = smul.addr %s186, 4
      %s188 = scalar_lea.vmem %s4, %s187
      %s189 = smul.u32 2, %s15
      %p190 = scmp.lt.s32.totalorder %s189, 3
      %s191 = scalar_select %p190, %s189, 3
      %s192 = smul.addr %s191, 4
      %s193 = scalar_lea.vmem %s0, %s192
      %s194 = smul.u32 2, %s15
      %p195 = scmp.lt.s32.totalorder %s15, 1
      %s196 = scalar_select %p195, %s15, 1
      %s197 = smul.addr %s196, 3
      %s198 = smul.addr %s197, 4
      %s199 = scalar_lea.vmem %s4, %s198
      %v201 = vld [vmem:[%s193] sm:$0xf]
      %v202 = vld [vmem:[%s193 + $0x4] sm:$0xf]
      %v203 = vld [vmem:[%s1] sm:$0xf]
      %v204 = vld [vmem:[%s1 + $0x4] sm:$0xf]
      %v205 = vld [vmem:[%s1 + $0x8] sm:$0xf]
      %v206 = vld [vmem:[%s1 + $0xc] sm:$0xf]
      %v207 = vld [vmem:[%s1 + $0x10] sm:$0xf]
      %v208 = vld [vmem:[%s1 + $0x14] sm:$0xf]
      %v211 = vunpack.c.l.b16 %v201
      %v212 = vunpack.c.l.b16 %v202
      %v213 = vpack.c.b16 %v212, %v211
      %v220 = vunpack.c.l.b16 %v203
      %v221 = vunpack.c.l.b16 %v204
      %v222 = vunpack.c.l.b16 %v205
      %v223 = vunpack.c.l.b16 %v206
      %v224 = vunpack.c.l.b16 %v207
      %v225 = vunpack.c.l.b16 %v208
      %v226 = vpack.c.b16 %v221, %v220
      %v227 = vpack.c.b16 %v223, %v222
      %v228 = vpack.c.b16 %v225, %v224
      %vm232 = vcmask 392192
      %v234 = vsel %vm232, %v213, 0
      %236 = vmatpush.bf16.msra.mxu0 0
      %237 = vmatpush.bf16.msra.mxu0 0
      %238 = vmatpush.bf16.msra.mxu0 0
      %239 = vmatpush.bf16.msra.mxu0 0
      %240 = vmatpush.bf16.msra.mxu0 0
      %241 = vmatpush.bf16.msra.mxu0 %v228
      %242 = vmatpush.bf16.msra.mxu0 %v227
      %243 = vmatpush.bf16.msra.mxu0 %v226
      %244 = vmatmul.bf16.gmra.mxu0 %v234
      %v245 = vpop.f32.mrf.mxu0
      %v246 = vadd.f32 0.0, %v245
      %v247 = vpop.f32.mrf.mxu0
      %v248 = vadd.f32 0.0, %v247
      %249 = vdwg.mxu0
      %v250 = vld [vmem:[%s2] sm:$0xff]
      %v251 = vld [vmem:[%s2 + $0x8] sm:$0xff]
      %v252 = vadd.f32 %v246, %v250
      %v253 = vadd.f32 %v248, %v251
      %v254 = vld [vmem:[%s3] sm:$0x1]
      %255 = vst [vmem:[#allocation2] sm:$0x1] %v254
      %256 = vst [vmem:[#allocation2 + $0x1] sm:$0xff] %v252
      %257 = vst [vmem:[#allocation2 + $0x9] sm:$0xff] %v253
      %v258 = vld [vmem:[#allocation2] sm:$0xff]
      %v259 = vld [vmem:[#allocation2 + $0x8] sm:$0xff]
      %v260 = vld [vmem:[#allocation2 + $0x10] sm:$0x1]
      %v261 = vpack.c.bf16 %v258, %v258
      %v262 = vpack.c.bf16 %v259, %v259
      %v263 = vpack.c.bf16 %v260, %v260
      %264 = vst [vmem:[%s199] sm:$0xf] %v261
      %265 = vst [vmem:[%s199 + $0x4] sm:$0xf] %v262
      %vm266 = vcmask 1040384
      %vm267 = vsmask.f32 256
      %vm268 = vmand %vm266, %vm267
      %v269 = vld [vmem:[%s199 + $0x8] sm:$0x1]
      %v270 = vsel %vm268, %v263, %v269
      %271 = vst [vmem:[%s199 + $0x8] sm:$0x1] %v270
      %p272 = scmp.lt.s32.totalorder %s15, 1
      %s273 = scalar_select %p272, %s15, 1
      %s274 = smul.addr %s273, 3
      %s275 = smul.addr %s274, 4
      %s276 = scalar_lea.vmem %s4, %s275
      // Predicated region
      $region37: #{_forward_impl.1} parent=35 // pred_check
        %p277 = pneg %p122
      $region38: #{_forward_impl.1} parent=35 // pred_check_branch
        %279 = sbr.rel (%p277) target = $region40
      $region39: #{_forward_impl.1} parent=35 // pred_region
        _
      $region40: #{_forward_impl.1} parent=35 // pred_fallthru
        _
    $region36: #{_forward_impl.1} parent=5 // pred_fallthru
      _
    %p280 = scmp.le.s32.totalorder 2, %s10
    // Predicated region
    $region41: #{_forward_impl.1} parent=5 // pred_check
      %p281 = pneg %p280
    $region42: #{_forward_impl.1} parent=5 // pred_check_branch
      %283 = sbr.rel (%p281) target = $region44
    $region43: #{_forward_impl.1} parent=5 // pred_region
      %s284 = ssub.s32 %s10, 2
      // Predicated region
      $region45: #{_forward_impl.1} parent=43 // pred_check
        %p285 = pneg %p128
      $region46: #{_forward_impl.1} parent=43 // pred_check_branch
        %287 = sbr.rel (%p285) target = $region48
      $region47: #{_forward_impl.1} parent=43 // pred_region
        %p288 = scmp.lt.s32.totalorder %s16, 1
        %s289 = scalar_select %p288, %s16, 1
        %s290 = smul.addr %s289, 3
        %s291 = smul.addr %s290, 4
        %s292 = scalar_lea.vmem %s4, %s291
      $region48: #{_forward_impl.1} parent=43 // pred_fallthru
        _
    $region44: #{_forward_impl.1} parent=5 // pred_fallthru
      _
  $region6: #{_forward_impl.1} parent=0 // loop_footer
    %s14 = sadd.s32 1, %s10
  $region7: #{_forward_impl.1} parent=0 // loop_footer_branch
    %9 = sbr.rel target = $region3
  $region8: #{_forward_impl.1} parent=0 // loop_exit
    _

// kernel: _forward_impl.1
$region0: #{_forward_impl.1}
  #allocation0 [shape = 'u32[]', space=smem, size = 0x4, offset = 0x4, fixed_abs, tag = 'smem constant byte address 0x4 - core index']
  #allocation1 [shape = 'u32[72,128]{1,0:T(1,128)}', space=vmem, size = 0x9000, scoped, tag = 'internal scratch']
  #allocation2 [shape = 'f32[1,17,128]{2,1,0:T(8,128)}', space=vmem, size = 0x3000, scoped, tag = 'scratch operand']
  %s0 = inlined_call_operand.vmem [shape: bf16[32,48], index: 0, kind: input, shape index: {}]
  %s1 = inlined_call_operand.vmem [shape: bf16[48,128], index: 1, kind: input, shape index: {}]
  %s2 = inlined_call_operand.vmem [shape: f32[16,128], index: 2, kind: input, shape index: {}]
  %s3 = inlined_call_operand.vmem [shape: f32[1,128], index: 3, kind: input, shape index: {}]
  %s4 = inlined_call_operand.vmem [shape: bf16[2,17,128], index: 4, kind: output, shape index: {}]
  %s5 = sld [smem:[#allocation0]]
  $region49: #{_forward_impl.1} parent=0
    _
  %s7 = ssub.s32 1, %s5
  %s8 = scalar_select 0, %s7, %s5
  loop: start=0, step=1, limit=4
  $region2: #{_forward_impl.1} parent=0 // loop_pre_header
    _
  $region3: #{_forward_impl.1} parent=0 // loop_header
    %s10 = sphi 0, %s14
    %p11 = scmp.ge.s32.totalorder %s10, 4
    %s20 = sphi 0, %s22
    %s23 = sphi 0, %s20
    %s24 = sphi 0, %s23
    %s40 = sphi 0, %s24
    %s44 = sphi 0, %s44
    %s46 = sphi 0, %s44
    %s47 = sphi 0, %s46
    %s61 = sphi 0, %s47
    %s65 = sphi 0, %s65
    %s67 = sphi 0, %s65
    %s68 = sphi 0, %s67
    %s82 = sphi 0, %s68
    %s86 = sphi 0, %s86
    %s88 = sphi 0, %s86
    %s89 = sphi 0, %s88
    %s103 = sphi 0, %s89
    %s109 = sphi 0, %s111
    %s112 = sphi 0, %s109
    %s113 = sphi 0, %s112
    %s129 = sphi 0, %s113
  $region4: #{_forward_impl.1} parent=0 // loop_header_branch
    %13 = sbr.rel (%p11) target = $region8
  $region5: #{_forward_impl.1} parent=0 // loop_body
    %s15 = ssub.s32 %s10, 1
    %s16 = ssub.s32 %s10, 2
    %s17 = sadd.s32 %s10, 1
    %s18 = ssub.s32 %s10, %s17
    %p19 = scmp.eq.s32.totalorder %s18, 0
    %s21 = sadd.s32 %s20, 1
    %s22 = scalar_select %p19, %s20, %s21
    %p25 = pneg %p19
    %p26 = scmp.eq.s32.totalorder %s10, 1
    %p27 = por %p25, %p26
    %p28 = scmp.ne.s32.totalorder %s20, %s23
    %p29 = scmp.eq.s32.totalorder %s10, 0
    %p30 = por %p28, %p29
    %p31 = scmp.ne.s32.totalorder %s20, %s23
    %p32 = scmp.eq.s32.totalorder %s15, 1
    %p33 = por %p31, %p32
    %p34 = scmp.ne.s32.totalorder %s23, %s24
    %p35 = scmp.eq.s32.totalorder %s15, 0
    %p36 = por %p34, %p35
    %p37 = scmp.ne.s32.totalorder %s23, %s24
    %p38 = scmp.eq.s32.totalorder %s16, 1
    %p39 = por %p37, %p38
    %p41 = scmp.ne.s32.totalorder %s24, %s40
    %p42 = scmp.eq.s32.totalorder %s16, 0
    %p43 = por %p41, %p42
    %s45 = sadd.s32 %s44, 1
    %p48 = scmp.eq.s32.totalorder %s10, 1
    %p49 = scmp.ne.s32.totalorder %s44, %s46
    %p50 = scmp.eq.s32.totalorder %s10, 0
    %p51 = por %p49, %p50
    %p52 = scmp.ne.s32.totalorder %s44, %s46
    %p53 = scmp.eq.s32.totalorder %s15, 1
    %p54 = por %p52, %p53
    %p55 = scmp.ne.s32.totalorder %s46, %s47
    %p56 = scmp.eq.s32.totalorder %s15, 0
    %p57 = por %p55, %p56
    %p58 = scmp.ne.s32.totalorder %s46, %s47
    %p59 = scmp.eq.s32.totalorder %s16, 1
    %p60 = por %p58, %p59
    %p62 = scmp.ne.s32.totalorder %s47, %s61
    %p63 = scmp.eq.s32.totalorder %s16, 0
    %p64 = por %p62, %p63
    %s66 = sadd.s32 %s65, 1
    %p69 = scmp.eq.s32.totalorder %s10, 1
    %p70 = scmp.ne.s32.totalorder %s65, %s67
    %p71 = scmp.eq.s32.totalorder %s10, 0
    %p72 = por %p70, %p71
    %p73 = scmp.ne.s32.totalorder %s65, %s67
    %p74 = scmp.eq.s32.totalorder %s15, 1
    %p75 = por %p73, %p74
    %p76 = scmp.ne.s32.totalorder %s67, %s68
    %p77 = scmp.eq.s32.totalorder %s15, 0
    %p78 = por %p76, %p77
    %p79 = scmp.ne.s32.totalorder %s67, %s68
    %p80 = scmp.eq.s32.totalorder %s16, 1
    %p81 = por %p79, %p80
    %p83 = scmp.ne.s32.totalorder %s68, %s82
    %p84 = scmp.eq.s32.totalorder %s16, 0
    %p85 = por %p83, %p84
    %s87 = sadd.s32 %s86, 1
    %p90 = scmp.eq.s32.totalorder %s10, 1
    %p91 = scmp.ne.s32.totalorder %s86, %s88
    %p92 = scmp.eq.s32.totalorder %s10, 0
    %p93 = por %p91, %p92
    %p94 = scmp.ne.s32.totalorder %s86, %s88
    %p95 = scmp.eq.s32.totalorder %s15, 1
    %p96 = por %p94, %p95
    %p97 = scmp.ne.s32.totalorder %s88, %s89
    %p98 = scmp.eq.s32.totalorder %s15, 0
    %p99 = por %p97, %p98
    %p100 = scmp.ne.s32.totalorder %s88, %s89
    %p101 = scmp.eq.s32.totalorder %s16, 1
    %p102 = por %p100, %p101
    %p104 = scmp.ne.s32.totalorder %s89, %s103
    %p105 = scmp.eq.s32.totalorder %s16, 0
    %p106 = por %p104, %p105
    %s107 = ssub.s32 %s10, %s17
    %p108 = scmp.eq.s32.totalorder %s107, 0
    %s110 = sadd.s32 %s109, 1
    %s111 = scalar_select %p108, %s109, %s110
    %p114 = pneg %p108
    %p115 = scmp.eq.s32.totalorder %s10, 1
    %p116 = por %p114, %p115
    %p117 = scmp.ne.s32.totalorder %s109, %s112
    %p118 = scmp.eq.s32.totalorder %s10, 0
    %p119 = por %p117, %p118
    %p120 = scmp.ne.s32.totalorder %s109, %s112
    %p121 = scmp.eq.s32.totalorder %s15, 1
    %p122 = por %p120, %p121
    %p123 = scmp.ne.s32.totalorder %s112, %s113
    %p124 = scmp.eq.s32.totalorder %s15, 0
    %p125 = por %p123, %p124
    %p126 = scmp.ne.s32.totalorder %s112, %s113
    %p127 = scmp.eq.s32.totalorder %s16, 1
    %p128 = por %p126, %p127
    %p130 = scmp.ne.s32.totalorder %s113, %s129
    %p131 = scmp.eq.s32.totalorder %s16, 0
    %p132 = por %p130, %p131
    %p133 = scmp.le.s32.totalorder 1, %s10
    %p134 = scmp.lt.s32.totalorder %s10, 3
    %p135 = pnand %p133, %p134
    %p136 = pneg %p135
    // Predicated region
    $region9: #{_forward_impl.1} parent=5 // pred_check
      _
    $region10: #{_forward_impl.1} parent=5 // pred_check_branch
      %138 = sbr.rel (%p135) target = $region12
    $region11: #{_forward_impl.1} parent=5 // pred_region
      %s139 = ssub.s32 %s10, 1
      // Predicated region
      $region13: #{_forward_impl.1} parent=11 // pred_check
        %p140 = pneg %p57
      $region14: #{_forward_impl.1} parent=11 // pred_check_branch
        %142 = sbr.rel (%p140) target = $region16
      $region15: #{_forward_impl.1} parent=11 // pred_region
        _
      $region16: #{_forward_impl.1} parent=11 // pred_fallthru
        _
      // Predicated region
      $region17: #{_forward_impl.1} parent=11 // pred_check
        %p143 = pneg %p78
      $region18: #{_forward_impl.1} parent=11 // pred_check_branch
        %145 = sbr.rel (%p143) target = $region20
      $region19: #{_forward_impl.1} parent=11 // pred_region
        _
      $region20: #{_forward_impl.1} parent=11 // pred_fallthru
        _
      // Predicated region
      $region21: #{_forward_impl.1} parent=11 // pred_check
        %p146 = pneg %p99
      $region22: #{_forward_impl.1} parent=11 // pred_check_branch
        %148 = sbr.rel (%p146) target = $region24
      $region23: #{_forward_impl.1} parent=11 // pred_region
        _
      $region24: #{_forward_impl.1} parent=11 // pred_fallthru
        _
    $region12: #{_forward_impl.1} parent=5 // pred_fallthru
      _
    %p149 = scmp.lt.s32.totalorder %s10, 2
    // Predicated region
    $region25: #{_forward_impl.1} parent=5 // pred_check
      %p150 = pneg %p149
    $region26: #{_forward_impl.1} parent=5 // pred_check_branch
      %152 = sbr.rel (%p150) target = $region28
    $region27: #{_forward_impl.1} parent=5 // pred_region
      // Predicated region
      $region29: #{_forward_impl.1} parent=27 // pred_check
        %p153 = pneg %p30
      $region30: #{_forward_impl.1} parent=27 // pred_check_branch
        %155 = sbr.rel (%p153) target = $region32
      $region31: #{_forward_impl.1} parent=27 // pred_region
        %s156 = smul.u32 2, %s10
        %p157 = scmp.lt.s32.totalorder %s156, 3
        %s158 = scalar_select %p157, %s156, 3
        %s159 = smul.addr %s158, 4
        %s160 = scalar_lea.vmem %s0, %s159
        %s161 = smul.u32 2, %s10
      $region32: #{_forward_impl.1} parent=27 // pred_fallthru
        _
    $region28: #{_forward_impl.1} parent=5 // pred_fallthru
      _
    %p162 = scmp.le.s32.totalorder 1, %s10
    %p163 = scmp.lt.s32.totalorder %s10, 3
    %p164 = pnand %p162, %p163
    %p165 = pneg %p164
    // Predicated region
    $region33: #{_forward_impl.1} parent=5 // pred_check
      _
    $region34: #{_forward_impl.1} parent=5 // pred_check_branch
      %167 = sbr.rel (%p164) target = $region36
    $region35: #{_forward_impl.1} parent=5 // pred_region
      %s168 = ssub.s32 %s10, 1
      %s169 = smul.u32 2, %s15
      %p170 = scmp.lt.s32.totalorder %s169, 3
      %s171 = scalar_select %p170, %s169, 3
      %s172 = smul.addr %s171, 4
      %s173 = scalar_lea.vmem %s0, %s172
      %p174 = pneg %p36
      %p175 = pneg %p33
      %p176 = pneg %p57
      %p177 = pneg %p54
      %p178 = pneg %p78
      %p179 = pneg %p75
      %p180 = pneg %p99
      %p181 = pneg %p96
      %p182 = pneg %p125
      %p183 = pneg %p122
      %p184 = scmp.lt.s32.totalorder %s15, 1
      %s185 = scalar_select %p184, %s15, 1
      %s186 = smul.addr %s185, 3
      %s187 = smul.addr %s186, 4
      %s188 = scalar_lea.vmem %s4, %s187
      %s189 = smul.u32 2, %s15
      %p190 = scmp.lt.s32.totalorder %s189, 3
      %s191 = scalar_select %p190, %s189, 3
      %s192 = smul.addr %s191, 4
      %s193 = scalar_lea.vmem %s0, %s192
      %s194 = smul.u32 2, %s15
      %p195 = scmp.lt.s32.totalorder %s15, 1
      %s196 = scalar_select %p195, %s15, 1
      %s197 = smul.addr %s196, 3
      %s198 = smul.addr %s197, 4
      %s199 = scalar_lea.vmem %s4, %s198
      %v201 = vld [vmem:[%s193] sm:$0xf]
      %v202 = vld [vmem:[%s193 + $0x4] sm:$0xf]
      %v203 = vld [vmem:[%s1] sm:$0xf]
      %v204 = vld [vmem:[%s1 + $0x4] sm:$0xf]
      %v205 = vld [vmem:[%s1 + $0x8] sm:$0xf]
      %v206 = vld [vmem:[%s1 + $0xc] sm:$0xf]
      %v207 = vld [vmem:[%s1 + $0x10] sm:$0xf]
      %v208 = vld [vmem:[%s1 + $0x14] sm:$0xf]
      %v211 = vunpack.c.l.b16 %v201
      %v212 = vunpack.c.l.b16 %v202
      %v213 = vpack.c.b16 %v212, %v211
      %v220 = vunpack.c.l.b16 %v203
      %v221 = vunpack.c.l.b16 %v204
      %v222 = vunpack.c.l.b16 %v205
      %v223 = vunpack.c.l.b16 %v206
      %v224 = vunpack.c.l.b16 %v207
      %v225 = vunpack.c.l.b16 %v208
      %v226 = vpack.c.b16 %v221, %v220
      %v227 = vpack.c.b16 %v223, %v222
      %v228 = vpack.c.b16 %v225, %v224
      %vm232 = vcmask 392192
      %v234 = vsel %vm232, %v213, 0
      %236 = vmatpush.bf16.msra.mxu0 0
      %237 = vmatpush.bf16.msra.mxu0 0
      %238 = vmatpush.bf16.msra.mxu0 0
      %239 = vmatpush.bf16.msra.mxu0 0
      %240 = vmatpush.bf16.msra.mxu0 0
      %241 = vmatpush.bf16.msra.mxu0 %v228
      %242 = vmatpush.bf16.msra.mxu0 %v227
      %243 = vmatpush.bf16.msra.mxu0 %v226
      %244 = vmatmul.bf16.gmra.mxu0 %v234
      %v245 = vpop.f32.mrf.mxu0
      %v246 = vadd.f32 0.0, %v245
      %v247 = vpop.f32.mrf.mxu0
      %v248 = vadd.f32 0.0, %v247
      %249 = vdwg.mxu0
      %v250 = vld [vmem:[%s2] sm:$0xff]
      %v251 = vld [vmem:[%s2 + $0x8] sm:$0xff]
      %v252 = vadd.f32 %v246, %v250
      %v253 = vadd.f32 %v248, %v251
      %v254 = vld [vmem:[%s3] sm:$0x1]
      %255 = vst [vmem:[#allocation2] sm:$0x1] %v254
      %256 = vst [vmem:[#allocation2 + $0x1] sm:$0xff] %v252
      %257 = vst [vmem:[#allocation2 + $0x9] sm:$0xff] %v253
      %v258 = vld [vmem:[#allocation2] sm:$0xff]
      %v259 = vld [vmem:[#allocation2 + $0x8] sm:$0xff]
      %v260 = vld [vmem:[#allocation2 + $0x10] sm:$0x1]
      %v261 = vpack.c.bf16 %v258, %v258
      %v262 = vpack.c.bf16 %v259, %v259
      %v263 = vpack.c.bf16 %v260, %v260
      %264 = vst [vmem:[%s199] sm:$0xf] %v261
      %265 = vst [vmem:[%s199 + $0x4] sm:$0xf] %v262
      %vm266 = vcmask 1040384
      %vm267 = vsmask.f32 256
      %vm268 = vmand %vm266, %vm267
      %v269 = vld [vmem:[%s199 + $0x8] sm:$0x1]
      %v270 = vsel %vm268, %v263, %v269
      %271 = vst [vmem:[%s199 + $0x8] sm:$0x1] %v270
      %p272 = scmp.lt.s32.totalorder %s15, 1
      %s273 = scalar_select %p272, %s15, 1
      %s274 = smul.addr %s273, 3
      %s275 = smul.addr %s274, 4
      %s276 = scalar_lea.vmem %s4, %s275
      // Predicated region
      $region37: #{_forward_impl.1} parent=35 // pred_check
        %p277 = pneg %p122
      $region38: #{_forward_impl.1} parent=35 // pred_check_branch
        %279 = sbr.rel (%p277) target = $region40
      $region39: #{_forward_impl.1} parent=35 // pred_region
        _
      $region40: #{_forward_impl.1} parent=35 // pred_fallthru
        _
    $region36: #{_forward_impl.1} parent=5 // pred_fallthru
      _
    %p280 = scmp.le.s32.totalorder 2, %s10
    // Predicated region
    $region41: #{_forward_impl.1} parent=5 // pred_check
      %p281 = pneg %p280
    $region42: #{_forward_impl.1} parent=5 // pred_check_branch
      %283 = sbr.rel (%p281) target = $region44
    $region43: #{_forward_impl.1} parent=5 // pred_region
      %s284 = ssub.s32 %s10, 2
      // Predicated region
      $region45: #{_forward_impl.1} parent=43 // pred_check
        %p285 = pneg %p128
      $region46: #{_forward_impl.1} parent=43 // pred_check_branch
        %287 = sbr.rel (%p285) target = $region48
      $region47: #{_forward_impl.1} parent=43 // pred_region
        %p288 = scmp.lt.s32.totalorder %s16, 1
        %s289 = scalar_select %p288, %s16, 1
        %s290 = smul.addr %s289, 3
        %s291 = smul.addr %s290, 4
        %s292 = scalar_lea.vmem %s4, %s291
      $region48: #{_forward_impl.1} parent=43 // pred_fallthru
        _
    $region44: #{_forward_impl.1} parent=5 // pred_fallthru
      _
  $region6: #{_forward_impl.1} parent=0 // loop_footer
    %s14 = sadd.s32 1, %s10
  $region7: #{_forward_impl.1} parent=0 // loop_footer_branch
    %9 = sbr.rel target = $region3
  $region8: #{_forward_impl.1} parent=0 // loop_exit
    _

</llo_original>
